<compile_context>
chip_gen: v7x
topology: tpu7x:2x2x1
jax: 0.10.0
libtpu: 0.0.40
codegen_flags: <defaults>
</compile_context>

<pallas_src>
import functools

import jax
import jax.numpy as jnp
from jax.experimental import pallas as pl
from jax.experimental.pallas import tpu as pltpu

NEG_SLOPE = 0.01  # F.leaky_relu default negative_slope

D_ACTION = 128
D_STATE = 4
H1, H2, H3 = 16, 32, 64


def _leaky_relu(x):
    return jnp.where(x > 0, x, NEG_SLOPE * x)


def discriminator_kernel(a_ref, s_ref,
                         w1a_ref, w1b_ref, b1_ref,
                         w2_ref, b2_ref,
                         w3_ref, b3_ref,
                         w4_ref, b4_ref,
                         o_ref):
    # One batch tile per grid step; all four layers computed in VMEM with f32 accumulation.
    a = a_ref[...]          # (TILE_B, 128)
    s = s_ref[...]          # (TILE_B, 4)

    h = (jnp.dot(a, w1a_ref[...], preferred_element_type=jnp.float32)
         + jnp.dot(s, w1b_ref[...], preferred_element_type=jnp.float32)
         + b1_ref[...])
    h = _leaky_relu(h)

    h = jnp.dot(h, w2_ref[...], preferred_element_type=jnp.float32) + b2_ref[...]
    h = _leaky_relu(h)

    h = jnp.dot(h, w3_ref[...], preferred_element_type=jnp.float32) + b3_ref[...]
    h = _leaky_relu(h)

    # Last layer (64 -> 1) as a lane reduction on VPU/XLU instead of an N=1 matmul.
    # w4_ref is stored as a (1, 64) row; broadcast-multiply then reduce over lanes.
    z = jnp.sum(h * w4_ref[...], axis=-1, keepdims=True) + b4_ref[...]
    o_ref[...] = z.astype(o_ref.dtype)


def _round_up(x, m):
    return ((x + m - 1) // m) * m


@functools.partial(jax.jit, static_argnames=("tile_b",))
def discriminator_forward(action, state_code, params, *, tile_b=1024):
    """action: (B, 128), state_code: (B, 4) -> (B, 1)"""
    B = action.shape[0]
    w1a, w1b, b1, w2, b2, w3, b3, w4, b4 = params

    # Tile sizing: multiple of 8 (sublane granularity); pad batch so the grid is exact.
    TILE_B = min(tile_b, max(8, _round_up(B, 8)))
    B_pad = _round_up(B, TILE_B)
    if B_pad != B:
        pad = ((0, B_pad - B), (0, 0))
        action = jnp.pad(action, pad)
        state_code = jnp.pad(state_code, pad)

    grid = (B_pad // TILE_B,)

    # Batch-streamed inputs/outputs.
    a_spec = pl.BlockSpec((TILE_B, D_ACTION), lambda i: (i, 0))
    s_spec = pl.BlockSpec((TILE_B, D_STATE), lambda i: (i, 0))
    o_spec = pl.BlockSpec((TILE_B, 1), lambda i: (i, 0))

    # Weights/biases: full-array blocks, VMEM-resident across all grid steps.
    def resident(arr):
        return pl.BlockSpec(arr.shape, lambda i: (0, 0))

    weight_args = (w1a, w1b, b1, w2, b2, w3, b3, w4, b4)
    in_specs = [a_spec, s_spec] + [resident(w) for w in weight_args]

    out = pl.pallas_call(
        discriminator_kernel,
        out_shape=jax.ShapeDtypeStruct((B_pad, 1), jnp.float32),
        grid=grid,
        in_specs=in_specs,
        out_specs=o_spec,
        compiler_params=pltpu.CompilerParams(
            dimension_semantics=("parallel",)),
    )(action, state_code, *weight_args)

    return out[:B]


def init_params(key):
    """Deterministic synthetic params matching nn.Linear shapes of Discriminator.

    fc1 weight is stored pre-split: w1a (128,16) for `action`, w1b (4,16) for
    `state_code` (equivalent to slicing+transposing PyTorch's (16,132) weight).
    fc4 weight is stored as a (1,64) row (equivalent to PyTorch's (1,64) weight).
    Biases are kept 2D (1, out) so everything stays lane/sublane friendly.
    """
    def rnd(k, shape):
        return jax.random.normal(k, shape, dtype=jnp.float32) * 0.02

    keys = jax.random.split(key, 9)
    w1a = rnd(keys[0], (D_ACTION, H1))
    w1b = rnd(keys[1], (D_STATE, H1))
    b1 = rnd(keys[2], (1, H1))
    w2 = rnd(keys[3], (H1, H2))
    b2 = rnd(keys[4], (1, H2))
    w3 = rnd(keys[5], (H2, H3))
    b3 = rnd(keys[6], (1, H3))
    w4 = rnd(keys[7], (1, H3))   # row vector; logit = sum(h * w4) + b4
    b4 = rnd(keys[8], (1, 1))
    return (w1a, w1b, b1, w2, b2, w3, b3, w4, b4)


def reference_forward(action, state_code, params):
    w1a, w1b, b1, w2, b2, w3, b3, w4, b4 = params
    w1 = jnp.concatenate([w1a, w1b], axis=0)            # (132, 16)
    x = jnp.concatenate([action, state_code], axis=1)   # (B, 132)
    h = jax.nn.leaky_relu(x @ w1 + b1, NEG_SLOPE)
    h = jax.nn.leaky_relu(h @ w2 + b2, NEG_SLOPE)
    h = jax.nn.leaky_relu(h @ w3 + b3, NEG_SLOPE)
    return h @ w4.T + b4


if __name__ == "__main__":
    key = jax.random.PRNGKey(0)
    k_a, k_s, k_p = jax.random.split(key, 3)

    B = 2
    action = jax.random.normal(k_a, (B, D_ACTION), dtype=jnp.float32)
    state_code = jax.random.normal(k_s, (B, D_STATE), dtype=jnp.float32)
    params = init_params(k_p)

    out = discriminator_forward(action, state_code, params)
    out = jax.block_until_ready(out)

    ref = reference_forward(action, state_code, params)
    assert out.shape == (B, 1)
    assert jnp.allclose(out, ref, atol=1e-5, rtol=1e-5)

    # Also exercise a multi-tile batch (grid > 1, padding path exercised too).
    B2 = 2500
    k_a2, k_s2 = jax.random.split(jax.random.fold_in(key, 7))
    action2 = jax.random.normal(k_a2, (B2, D_ACTION), dtype=jnp.float32)
    state2 = jax.random.normal(k_s2, (B2, D_STATE), dtype=jnp.float32)
    out2 = jax.block_until_ready(
        discriminator_forward(action2, state2, params, tile_b=1024))
    ref2 = reference_forward(action2, state2, params)
    assert out2.shape == (B2, 1)
    assert jnp.allclose(out2, ref2, atol=1e-4, rtol=1e-4)

    print("KERNEL_OK")
</pallas_src>

<mosaic_0001>
module attributes {stable_mosaic.version = 11 : i64} {
  func.func @discriminator_kernel(%arg0: i32, %arg1: memref<8x128xf32, #tpu.memory_space<vmem>>, %arg2: memref<8x4xf32, #tpu.memory_space<vmem>>, %arg3: memref<128x16xf32, #tpu.memory_space<vmem>>, %arg4: memref<4x16xf32, #tpu.memory_space<vmem>>, %arg5: memref<1x16xf32, #tpu.memory_space<vmem>>, %arg6: memref<16x32xf32, #tpu.memory_space<vmem>>, %arg7: memref<1x32xf32, #tpu.memory_space<vmem>>, %arg8: memref<32x64xf32, #tpu.memory_space<vmem>>, %arg9: memref<1x64xf32, #tpu.memory_space<vmem>>, %arg10: memref<1x64xf32, #tpu.memory_space<vmem>>, %arg11: memref<1x1xf32, #tpu.memory_space<vmem>>, %arg12: memref<8x1xf32, #tpu.memory_space<vmem>>) attributes {dimension_semantics = [#tpu.dimension_semantics<parallel>], iteration_bounds = array<i64: 1>, scalar_prefetch = 0 : i64, scratch_operands = 0 : i64, tpu.core_type = #tpu.core_type<tc>, window_params = [{transform_indices = @transform_0, window_bounds = array<i64: 8, 128>}, {transform_indices = @transform_1, window_bounds = array<i64: 8, 4>}, {pipeline_mode = #tpu.pipeline_mode<synchronous>, transform_indices = @transform_2, window_bounds = array<i64: 128, 16>}, {pipeline_mode = #tpu.pipeline_mode<synchronous>, transform_indices = @transform_3, window_bounds = array<i64: 4, 16>}, {pipeline_mode = #tpu.pipeline_mode<synchronous>, transform_indices = @transform_4, window_bounds = array<i64: 1, 16>}, {pipeline_mode = #tpu.pipeline_mode<synchronous>, transform_indices = @transform_5, window_bounds = array<i64: 16, 32>}, {pipeline_mode = #tpu.pipeline_mode<synchronous>, transform_indices = @transform_6, window_bounds = array<i64: 1, 32>}, {pipeline_mode = #tpu.pipeline_mode<synchronous>, transform_indices = @transform_7, window_bounds = array<i64: 32, 64>}, {pipeline_mode = #tpu.pipeline_mode<synchronous>, transform_indices = @transform_8, window_bounds = array<i64: 1, 64>}, {pipeline_mode = #tpu.pipeline_mode<synchronous>, transform_indices = @transform_9, window_bounds = array<i64: 1, 64>}, {pipeline_mode = #tpu.pipeline_mode<synchronous>, transform_indices = @transform_10, window_bounds = array<i64: 1, 1>}, {transform_indices = @transform_11, window_bounds = array<i64: 8, 1>}]} {
    %c0 = arith.constant 0 : index
    %c0_0 = arith.constant 0 : index
    %0 = vector.load %arg1[%c0, %c0_0] : memref<8x128xf32, #tpu.memory_space<vmem>>, vector<8x128xf32>
    %c0_1 = arith.constant 0 : index
    %c0_2 = arith.constant 0 : index
    %1 = vector.load %arg2[%c0_1, %c0_2] : memref<8x4xf32, #tpu.memory_space<vmem>>, vector<8x4xf32>
    %c0_3 = arith.constant 0 : index
    %c0_4 = arith.constant 0 : index
    %2 = vector.load %arg3[%c0_3, %c0_4] : memref<128x16xf32, #tpu.memory_space<vmem>>, vector<128x16xf32>
    %cst = arith.constant dense<0.000000e+00> : vector<8x16xf32>
    %3 = tpu.matmul %0, %2, %cst {dimension_numbers = #tpu.dot_dimension_numbers<[1], [0], [0], [1], [0, 0, 1, 1], [], []>} : vector<8x128xf32>, vector<128x16xf32>, vector<8x16xf32> -> vector<8x16xf32>
    %c0_5 = arith.constant 0 : index
    %c0_6 = arith.constant 0 : index
    %4 = vector.load %arg4[%c0_5, %c0_6] : memref<4x16xf32, #tpu.memory_space<vmem>>, vector<4x16xf32>
    %cst_7 = arith.constant dense<0.000000e+00> : vector<8x16xf32>
    %5 = tpu.matmul %1, %4, %cst_7 {dimension_numbers = #tpu.dot_dimension_numbers<[1], [0], [0], [1], [0, 0, 1, 1], [], []>} : vector<8x4xf32>, vector<4x16xf32>, vector<8x16xf32> -> vector<8x16xf32>
    %6 = arith.addf %3, %5 : vector<8x16xf32>
    %c0_8 = arith.constant 0 : index
    %c0_9 = arith.constant 0 : index
    %7 = vector.load %arg5[%c0_8, %c0_9] : memref<1x16xf32, #tpu.memory_space<vmem>>, vector<1x16xf32>
    %8 = vector.broadcast %7 : vector<1x16xf32> to vector<8x16xf32>
    %9 = arith.addf %6, %8 : vector<8x16xf32>
    %cst_10 = arith.constant 0.000000e+00 : f32
    %10 = vector.broadcast %cst_10 : f32 to vector<8x16xf32>
    %11 = arith.cmpf ogt, %9, %10 : vector<8x16xf32>
    %cst_11 = arith.constant 0.00999999977 : f32
    %12 = vector.broadcast %cst_11 : f32 to vector<8x16xf32>
    %13 = arith.mulf %12, %9 : vector<8x16xf32>
    %14 = arith.select %11, %9, %13 : vector<8x16xi1>, vector<8x16xf32>
    %c0_12 = arith.constant 0 : index
    %c0_13 = arith.constant 0 : index
    %15 = vector.load %arg6[%c0_12, %c0_13] : memref<16x32xf32, #tpu.memory_space<vmem>>, vector<16x32xf32>
    %cst_14 = arith.constant dense<0.000000e+00> : vector<8x32xf32>
    %16 = tpu.matmul %14, %15, %cst_14 {dimension_numbers = #tpu.dot_dimension_numbers<[1], [0], [0], [1], [0, 0, 1, 1], [], []>} : vector<8x16xf32>, vector<16x32xf32>, vector<8x32xf32> -> vector<8x32xf32>
    %c0_15 = arith.constant 0 : index
    %c0_16 = arith.constant 0 : index
    %17 = vector.load %arg7[%c0_15, %c0_16] : memref<1x32xf32, #tpu.memory_space<vmem>>, vector<1x32xf32>
    %18 = vector.broadcast %17 : vector<1x32xf32> to vector<8x32xf32>
    %19 = arith.addf %16, %18 : vector<8x32xf32>
    %cst_17 = arith.constant 0.000000e+00 : f32
    %20 = vector.broadcast %cst_17 : f32 to vector<8x32xf32>
    %21 = arith.cmpf ogt, %19, %20 : vector<8x32xf32>
    %cst_18 = arith.constant 0.00999999977 : f32
    %22 = vector.broadcast %cst_18 : f32 to vector<8x32xf32>
    %23 = arith.mulf %22, %19 : vector<8x32xf32>
    %24 = arith.select %21, %19, %23 : vector<8x32xi1>, vector<8x32xf32>
    %c0_19 = arith.constant 0 : index
    %c0_20 = arith.constant 0 : index
    %25 = vector.load %arg8[%c0_19, %c0_20] : memref<32x64xf32, #tpu.memory_space<vmem>>, vector<32x64xf32>
    %cst_21 = arith.constant dense<0.000000e+00> : vector<8x64xf32>
    %26 = tpu.matmul %24, %25, %cst_21 {dimension_numbers = #tpu.dot_dimension_numbers<[1], [0], [0], [1], [0, 0, 1, 1], [], []>} : vector<8x32xf32>, vector<32x64xf32>, vector<8x64xf32> -> vector<8x64xf32>
    %c0_22 = arith.constant 0 : index
    %c0_23 = arith.constant 0 : index
    %27 = vector.load %arg9[%c0_22, %c0_23] : memref<1x64xf32, #tpu.memory_space<vmem>>, vector<1x64xf32>
    %28 = vector.broadcast %27 : vector<1x64xf32> to vector<8x64xf32>
    %29 = arith.addf %26, %28 : vector<8x64xf32>
    %cst_24 = arith.constant 0.000000e+00 : f32
    %30 = vector.broadcast %cst_24 : f32 to vector<8x64xf32>
    %31 = arith.cmpf ogt, %29, %30 : vector<8x64xf32>
    %cst_25 = arith.constant 0.00999999977 : f32
    %32 = vector.broadcast %cst_25 : f32 to vector<8x64xf32>
    %33 = arith.mulf %32, %29 : vector<8x64xf32>
    %34 = arith.select %31, %29, %33 : vector<8x64xi1>, vector<8x64xf32>
    %c0_26 = arith.constant 0 : index
    %c0_27 = arith.constant 0 : index
    %35 = vector.load %arg10[%c0_26, %c0_27] : memref<1x64xf32, #tpu.memory_space<vmem>>, vector<1x64xf32>
    %36 = vector.broadcast %35 : vector<1x64xf32> to vector<8x64xf32>
    %37 = arith.mulf %34, %36 : vector<8x64xf32>
    %cst_28 = arith.constant dense<0.000000e+00> : vector<8xf32>
    %38 = vector.multi_reduction <add>, %37, %cst_28 [1] : vector<8x64xf32> to vector<8xf32>
    %39 = vector.shape_cast %38 : vector<8xf32> to vector<8x1xf32>
    %c0_29 = arith.constant 0 : index
    %c0_30 = arith.constant 0 : index
    %40 = vector.load %arg11[%c0_29, %c0_30] : memref<1x1xf32, #tpu.memory_space<vmem>>, vector<1x1xf32>
    %41 = vector.broadcast %40 : vector<1x1xf32> to vector<8x1xf32>
    %42 = arith.addf %39, %41 : vector<8x1xf32>
    %c0_31 = arith.constant 0 : index
    %c0_32 = arith.constant 0 : index
    %43 = vector.load %arg12[%c0_31, %c0_32] : memref<8x1xf32, #tpu.memory_space<vmem>>, vector<8x1xf32>
    tpu.vector_store %arg12[%c0_31, %c0_32], %42 {strides = array<i32>} : memref<8x1xf32, #tpu.memory_space<vmem>>, vector<8x1xf32>,
    return
  }
  func.func @transform_0(%arg0: i32) -> (i32, i32) {
    %c0_i32 = arith.constant 0 : i32
    %c0_i32_0 = arith.constant 0 : i32
    return %arg0, %c0_i32 : i32, i32
  }
  func.func @transform_1(%arg0: i32) -> (i32, i32) {
    %c0_i32 = arith.constant 0 : i32
    %c0_i32_0 = arith.constant 0 : i32
    return %arg0, %c0_i32 : i32, i32
  }
  func.func @transform_2(%arg0: i32) -> (i32, i32) {
    %c0_i32 = arith.constant 0 : i32
    %c0_i32_0 = arith.constant 0 : i32
    %c0_i32_1 = arith.constant 0 : i32
    return %c0_i32, %c0_i32_0 : i32, i32
  }
  func.func @transform_3(%arg0: i32) -> (i32, i32) {
    %c0_i32 = arith.constant 0 : i32
    %c0_i32_0 = arith.constant 0 : i32
    %c0_i32_1 = arith.constant 0 : i32
    return %c0_i32, %c0_i32_0 : i32, i32
  }
  func.func @transform_4(%arg0: i32) -> (i32, i32) {
    %c0_i32 = arith.constant 0 : i32
    %c0_i32_0 = arith.constant 0 : i32
    %c0_i32_1 = arith.constant 0 : i32
    return %c0_i32, %c0_i32_0 : i32, i32
  }
  func.func @transform_5(%arg0: i32) -> (i32, i32) {
    %c0_i32 = arith.constant 0 : i32
    %c0_i32_0 = arith.constant 0 : i32
    %c0_i32_1 = arith.constant 0 : i32
    return %c0_i32, %c0_i32_0 : i32, i32
  }
  func.func @transform_6(%arg0: i32) -> (i32, i32) {
    %c0_i32 = arith.constant 0 : i32
    %c0_i32_0 = arith.constant 0 : i32
    %c0_i32_1 = arith.constant 0 : i32
    return %c0_i32, %c0_i32_0 : i32, i32
  }
  func.func @transform_7(%arg0: i32) -> (i32, i32) {
    %c0_i32 = arith.constant 0 : i32
    %c0_i32_0 = arith.constant 0 : i32
    %c0_i32_1 = arith.constant 0 : i32
    return %c0_i32, %c0_i32_0 : i32, i32
  }
  func.func @transform_8(%arg0: i32) -> (i32, i32) {
    %c0_i32 = arith.constant 0 : i32
    %c0_i32_0 = arith.constant 0 : i32
    %c0_i32_1 = arith.constant 0 : i32
    return %c0_i32, %c0_i32_0 : i32, i32
  }
  func.func @transform_9(%arg0: i32) -> (i32, i32) {
    %c0_i32 = arith.constant 0 : i32
    %c0_i32_0 = arith.constant 0 : i32
    %c0_i32_1 = arith.constant 0 : i32
    return %c0_i32, %c0_i32_0 : i32, i32
  }
  func.func @transform_10(%arg0: i32) -> (i32, i32) {
    %c0_i32 = arith.constant 0 : i32
    %c0_i32_0 = arith.constant 0 : i32
    %c0_i32_1 = arith.constant 0 : i32
    return %c0_i32, %c0_i32_0 : i32, i32
  }
  func.func @transform_11(%arg0: i32) -> (i32, i32) {
    %c0_i32 = arith.constant 0 : i32
    %c0_i32_0 = arith.constant 0 : i32
    return %arg0, %c0_i32 : i32, i32
  }
}

</mosaic_0001>

<llo_original>
// kernel: discriminator_forward.1
$region0: #{discriminator_forward.1}
  #allocation0 [shape = 'u32[]', space=smem, size = 0x4, offset = 0x4, fixed_abs, tag = 'smem constant byte address 0x4 - core index']
  #allocation1 [shape = 'u32[144,128]{1,0:T(1,128)}', space=vmem, size = 0x12000, scoped, tag = 'internal scratch']
  #allocation2 [shape = 'f32[1,1]{1,0:T(1,128)S(1)}', space=vmem, size = 0x200, scoped, tag = 'scoped memory for discriminator_forward.1']
  %s0 = inlined_call_operand.vmem [shape: f32[8,128], index: 0, kind: input, shape index: {}]
  %s1 = inlined_call_operand.vmem [shape: f32[8,4], index: 1, kind: input, shape index: {}]
  %s2 = inlined_call_operand.vmem [shape: f32[128,16], index: 2, kind: input, shape index: {}]
  %s3 = inlined_call_operand.vmem [shape: f32[4,16], index: 3, kind: input, shape index: {}]
  %s4 = inlined_call_operand.vmem [shape: f32[1,16], index: 4, kind: input, shape index: {}]
  %s5 = inlined_call_operand.vmem [shape: f32[16,32], index: 5, kind: input, shape index: {}]
  %s6 = inlined_call_operand.vmem [shape: f32[1,32], index: 6, kind: input, shape index: {}]
  %s7 = inlined_call_operand.vmem [shape: f32[32,64], index: 7, kind: input, shape index: {}]
  %s8 = inlined_call_operand.vmem [shape: f32[1,64], index: 8, kind: input, shape index: {}]
  %s9 = inlined_call_operand.vmem [shape: f32[1,64], index: 9, kind: input, shape index: {}]
  %s10 = inlined_call_operand.<no memory space> [shape: f32[1,1], index: 10, kind: input, shape index: {}]
  %s11 = inlined_call_operand.vmem [shape: f32[8,1], index: 11, kind: output, shape index: {}]
  %s12 = sld [smem:[#allocation0]]
  $region54: #{discriminator_forward.1} parent=0
    _
  %s14 = ssub.s32 1, %s12
  %s15 = scalar_select 0, %s14, %s12
  %v16 = vstv %s10
  %17 = vst [vmem:[#allocation2] sm:$0x1] %v16
  // Predicated region
  $region2: #{discriminator_forward.1} parent=0 // pred_check
    _
  $region3: #{discriminator_forward.1} parent=0 // pred_check_branch
    %19 = sbr.rel (0) target = $region5
  $region4: #{discriminator_forward.1} parent=0 // pred_region
    _
  $region5: #{discriminator_forward.1} parent=0 // pred_fallthru
    _
  // Predicated region
  $region6: #{discriminator_forward.1} parent=0 // pred_check
    _
  $region7: #{discriminator_forward.1} parent=0 // pred_check_branch
    %21 = sbr.rel (0) target = $region9
  $region8: #{discriminator_forward.1} parent=0 // pred_region
    _
  $region9: #{discriminator_forward.1} parent=0 // pred_fallthru
    _
  // Predicated region
  $region10: #{discriminator_forward.1} parent=0 // pred_check
    _
  $region11: #{discriminator_forward.1} parent=0 // pred_check_branch
    %23 = sbr.rel (0) target = $region13
  $region12: #{discriminator_forward.1} parent=0 // pred_region
    _
  $region13: #{discriminator_forward.1} parent=0 // pred_fallthru
    _
  // Predicated region
  $region14: #{discriminator_forward.1} parent=0 // pred_check
    _
  $region15: #{discriminator_forward.1} parent=0 // pred_check_branch
    %25 = sbr.rel (0) target = $region17
  $region16: #{discriminator_forward.1} parent=0 // pred_region
    _
  $region17: #{discriminator_forward.1} parent=0 // pred_fallthru
    _
  // Predicated region
  $region18: #{discriminator_forward.1} parent=0 // pred_check
    _
  $region19: #{discriminator_forward.1} parent=0 // pred_check_branch
    %27 = sbr.rel (0) target = $region21
  $region20: #{discriminator_forward.1} parent=0 // pred_region
    _
  $region21: #{discriminator_forward.1} parent=0 // pred_fallthru
    _
  // Predicated region
  $region22: #{discriminator_forward.1} parent=0 // pred_check
    _
  $region23: #{discriminator_forward.1} parent=0 // pred_check_branch
    %29 = sbr.rel (0) target = $region25
  $region24: #{discriminator_forward.1} parent=0 // pred_region
    _
  $region25: #{discriminator_forward.1} parent=0 // pred_fallthru
    _
  // Predicated region
  $region26: #{discriminator_forward.1} parent=0 // pred_check
    _
  $region27: #{discriminator_forward.1} parent=0 // pred_check_branch
    %31 = sbr.rel (0) target = $region29
  $region28: #{discriminator_forward.1} parent=0 // pred_region
    _
  $region29: #{discriminator_forward.1} parent=0 // pred_fallthru
    _
  // Predicated region
  $region30: #{discriminator_forward.1} parent=0 // pred_check
    _
  $region31: #{discriminator_forward.1} parent=0 // pred_check_branch
    %33 = sbr.rel (0) target = $region33
  $region32: #{discriminator_forward.1} parent=0 // pred_region
    _
  $region33: #{discriminator_forward.1} parent=0 // pred_fallthru
    _
  // Predicated region
  $region34: #{discriminator_forward.1} parent=0 // pred_check
    _
  $region35: #{discriminator_forward.1} parent=0 // pred_check_branch
    %35 = sbr.rel (0) target = $region37
  $region36: #{discriminator_forward.1} parent=0 // pred_region
    _
  $region37: #{discriminator_forward.1} parent=0 // pred_fallthru
    _
  // Predicated region
  $region38: #{discriminator_forward.1} parent=0 // pred_check
    _
  $region39: #{discriminator_forward.1} parent=0 // pred_check_branch
    %37 = sbr.rel (0) target = $region41
  $region40: #{discriminator_forward.1} parent=0 // pred_region
    _
  $region41: #{discriminator_forward.1} parent=0 // pred_fallthru
    _
  // Predicated region
  $region42: #{discriminator_forward.1} parent=0 // pred_check
    _
  $region43: #{discriminator_forward.1} parent=0 // pred_check_branch
    %39 = sbr.rel (0) target = $region45
  $region44: #{discriminator_forward.1} parent=0 // pred_region
    _
  $region45: #{discriminator_forward.1} parent=0 // pred_fallthru
    _
  %v40 = vld [vmem:[%s0] sm:$0xff]
  %v41 = vld [vmem:[%s1] sm:$0xff]
  %v42 = vld [vmem:[%s2] sm:$0xff]
  %v43 = vld [vmem:[%s2 + $0x8] sm:$0xff]
  %v44 = vld [vmem:[%s2 + $0x10] sm:$0xff]
  %v45 = vld [vmem:[%s2 + $0x18] sm:$0xff]
  %v46 = vld [vmem:[%s2 + $0x20] sm:$0xff]
  %v47 = vld [vmem:[%s2 + $0x28] sm:$0xff]
  %v48 = vld [vmem:[%s2 + $0x30] sm:$0xff]
  %v49 = vld [vmem:[%s2 + $0x38] sm:$0xff]
  %v50 = vld [vmem:[%s2 + $0x40] sm:$0xff]
  %v51 = vld [vmem:[%s2 + $0x48] sm:$0xff]
  %v52 = vld [vmem:[%s2 + $0x50] sm:$0xff]
  %v53 = vld [vmem:[%s2 + $0x58] sm:$0xff]
  %v54 = vld [vmem:[%s2 + $0x60] sm:$0xff]
  %v55 = vld [vmem:[%s2 + $0x68] sm:$0xff]
  %v56 = vld [vmem:[%s2 + $0x70] sm:$0xff]
  %v57 = vld [vmem:[%s2 + $0x78] sm:$0xff]
  %v58 = vld [vmem:[%s3] sm:$0xf]
  %vm59 = vcmask 31744
  %v61 = vsel %vm59, %v41, 0
  %vm63 = vcmask 1043456
  %v65 = vsel %vm63, %v58, 0
  %67 = vmatprep.subr.mxu0 0.0
  %68 = vmatpush1.msra.mxu0 %v65
  %69 = vmatprep.subr.mxu0 0.0
  %70 = vmatpush1.msra.mxu0 0.0
  %71 = vmatprep.subr.mxu0 0.0
  %72 = vmatpush1.msra.mxu0 0.0
  %73 = vmatprep.subr.mxu0 0.0
  %74 = vmatpush1.msra.mxu0 0.0
  %75 = vmatprep.subr.mxu0 0.0
  %76 = vmatpush1.msra.mxu0 0.0
  %77 = vmatprep.subr.mxu0 0.0
  %78 = vmatpush1.msra.mxu0 0.0
  %79 = vmatprep.subr.mxu0 0.0
  %80 = vmatpush1.msra.mxu0 0.0
  %81 = vmatprep.subr.mxu0 0.0
  %82 = vmatpush1.msra.mxu0 0.0
  %83 = vmatprep.subr.mxu0 0.0
  %84 = vmatpush1.msra.mxu0 0.0
  %85 = vmatprep.subr.mxu0 0.0
  %86 = vmatpush1.msra.mxu0 0.0
  %87 = vmatprep.subr.mxu0 0.0
  %88 = vmatpush1.msra.mxu0 0.0
  %89 = vmatprep.subr.mxu0 0.0
  %90 = vmatpush1.msra.mxu0 0.0
  %91 = vmatprep.subr.mxu0 0.0
  %92 = vmatpush1.msra.mxu0 0.0
  %93 = vmatprep.subr.mxu0 0.0
  %94 = vmatpush1.msra.mxu0 0.0
  %95 = vmatprep.subr.mxu0 0.0
  %96 = vmatpush1.msra.mxu0 0.0
  %97 = vmatprep.subr.mxu0 0.0
  %98 = vmatpush1.msra.mxu0 0.0
  %99 = vmatprep.subr.mxu0 0.0
  %100 = vmatpush1.msra.mxu0 0.0
  %101 = vmatprep.subr.mxu0 0.0
  %102 = vmatpush1.msra.mxu0 0.0
  %103 = vmatprep.subr.mxu0 0.0
  %104 = vmatpush1.msra.mxu0 0.0
  %105 = vmatprep.subr.mxu0 0.0
  %106 = vmatpush1.msra.mxu0 0.0
  %107 = vmatprep.subr.mxu0 0.0
  %108 = vmatpush1.msra.mxu0 0.0
  %109 = vmatprep.subr.mxu0 0.0
  %110 = vmatpush1.msra.mxu0 0.0
  %111 = vmatprep.subr.mxu0 0.0
  %112 = vmatpush1.msra.mxu0 0.0
  %113 = vmatprep.subr.mxu0 0.0
  %114 = vmatpush1.msra.mxu0 0.0
  %115 = vmatprep.subr.mxu0 0.0
  %116 = vmatpush1.msra.mxu0 0.0
  %117 = vmatprep.subr.mxu0 0.0
  %118 = vmatpush1.msra.mxu0 0.0
  %119 = vmatprep.subr.mxu0 0.0
  %120 = vmatpush1.msra.mxu0 0.0
  %121 = vmatprep.subr.mxu0 0.0
  %122 = vmatpush1.msra.mxu0 0.0
  %123 = vmatprep.subr.mxu0 0.0
  %124 = vmatpush1.msra.mxu0 0.0
  %125 = vmatprep.subr.mxu0 0.0
  %126 = vmatpush1.msra.mxu0 0.0
  %127 = vmatprep.subr.mxu0 0.0
  %128 = vmatpush1.msra.mxu0 0.0
  %129 = vmatprep.subr.mxu0 0.0
  %130 = vmatpush1.msra.mxu0 0.0
  %131 = vmatprep.mubr.f32.mxu0 0.0
  %132 = vmatmul.mubr.f32.gmra.mrb[0].mxu0 %v61
  %v133 = vpop.f32.mrb[0].mxu0
  %v134 = vadd.f32 0.0, %v133
  %v135 = vpop.f32.mrb[0].mxu0
  %136 = vdwg.mxu0
  %137 = vmatprep.subr.mxu0 0.0
  %138 = vmatpush1.msra.mxu0 %v42
  %139 = vmatprep.subr.mxu0 0.0
  %140 = vmatpush1.msra.mxu0 %v43
  %141 = vmatprep.subr.mxu0 0.0
  %142 = vmatpush1.msra.mxu0 %v44
  %143 = vmatprep.subr.mxu0 0.0
  %144 = vmatpush1.msra.mxu0 %v45
  %145 = vmatprep.subr.mxu0 0.0
  %146 = vmatpush1.msra.mxu0 %v46
  %147 = vmatprep.subr.mxu0 0.0
  %148 = vmatpush1.msra.mxu0 %v47
  %149 = vmatprep.subr.mxu0 0.0
  %150 = vmatpush1.msra.mxu0 %v48
  %151 = vmatprep.subr.mxu0 0.0
  %152 = vmatpush1.msra.mxu0 %v49
  %153 = vmatprep.subr.mxu0 0.0
  %154 = vmatpush1.msra.mxu0 %v50
  %155 = vmatprep.subr.mxu0 0.0
  %156 = vmatpush1.msra.mxu0 %v51
  %157 = vmatprep.subr.mxu0 0.0
  %158 = vmatpush1.msra.mxu0 %v52
  %159 = vmatprep.subr.mxu0 0.0
  %160 = vmatpush1.msra.mxu0 %v53
  %161 = vmatprep.subr.mxu0 0.0
  %162 = vmatpush1.msra.mxu0 %v54
  %163 = vmatprep.subr.mxu0 0.0
  %164 = vmatpush1.msra.mxu0 %v55
  %165 = vmatprep.subr.mxu0 0.0
  %166 = vmatpush1.msra.mxu0 %v56
  %167 = vmatprep.subr.mxu0 0.0
  %168 = vmatpush1.msra.mxu0 %v57
  %169 = vmatprep.subr.mxu0 0.0
  %170 = vmatpush1.msra.mxu0 0.0
  %171 = vmatprep.subr.mxu0 0.0
  %172 = vmatpush1.msra.mxu0 0.0
  %173 = vmatprep.subr.mxu0 0.0
  %174 = vmatpush1.msra.mxu0 0.0
  %175 = vmatprep.subr.mxu0 0.0
  %176 = vmatpush1.msra.mxu0 0.0
  %177 = vmatprep.subr.mxu0 0.0
  %178 = vmatpush1.msra.mxu0 0.0
  %179 = vmatprep.subr.mxu0 0.0
  %180 = vmatpush1.msra.mxu0 0.0
  %181 = vmatprep.subr.mxu0 0.0
  %182 = vmatpush1.msra.mxu0 0.0
  %183 = vmatprep.subr.mxu0 0.0
  %184 = vmatpush1.msra.mxu0 0.0
  %185 = vmatprep.subr.mxu0 0.0
  %186 = vmatpush1.msra.mxu0 0.0
  %187 = vmatprep.subr.mxu0 0.0
  %188 = vmatpush1.msra.mxu0 0.0
  %189 = vmatprep.subr.mxu0 0.0
  %190 = vmatpush1.msra.mxu0 0.0
  %191 = vmatprep.subr.mxu0 0.0
  %192 = vmatpush1.msra.mxu0 0.0
  %193 = vmatprep.subr.mxu0 0.0
  %194 = vmatpush1.msra.mxu0 0.0
  %195 = vmatprep.subr.mxu0 0.0
  %196 = vmatpush1.msra.mxu0 0.0
  %197 = vmatprep.subr.mxu0 0.0
  %198 = vmatpush1.msra.mxu0 0.0
  %199 = vmatprep.subr.mxu0 0.0
  %200 = vmatpush1.msra.mxu0 0.0
  %201 = vmatprep.mubr.f32.mxu0 0.0
  %202 = vmatmul.mubr.f32.gmra.mrb[0].mxu0 %v40
  %v203 = vpop.f32.mrb[0].mxu0
  %v204 = vadd.f32 %v134, %v203
  %v205 = vpop.f32.mrb[0].mxu0
  %206 = vdwg.mxu0
  %v207 = vld [vmem:[%s4] sm:$0x1]
  %v209 = vlaneseq
  %v210 = vshrl.u32 %v209, 7
  %v211 = vsub.s32 0, %v210
  %v212 = vrot.slane %v207, %v211
  %v214 = vadd.f32 %v204, %v212
  %vm215 = vcmp.gt.f32.partialorder %v214, 0.0
  %v216 = vmul.f32 %v214, 0.01
  %v217 = vsel %vm215, %v214, %v216
  %v218 = vld [vmem:[%s5] sm:$0xff]
  %v219 = vld [vmem:[%s5 + $0x8] sm:$0xff]
  %v220 = vld [vmem:[%s6] sm:$0x1]
  %v222 = vlaneseq
  %v223 = vshrl.u32 %v222, 7
  %v224 = vsub.s32 0, %v223
  %v225 = vrot.slane %v220, %v224
  %vm227 = vcmask 130048
  %v229 = vsel %vm227, %v217, 0
  %231 = vmatprep.subr.mxu0 0.0
  %232 = vmatpush1.msra.mxu0 %v218
  %233 = vmatprep.subr.mxu0 0.0
  %234 = vmatpush1.msra.mxu0 %v219
  %235 = vmatprep.subr.mxu0 0.0
  %236 = vmatpush1.msra.mxu0 0.0
  %237 = vmatprep.subr.mxu0 0.0
  %238 = vmatpush1.msra.mxu0 0.0
  %239 = vmatprep.subr.mxu0 0.0
  %240 = vmatpush1.msra.mxu0 0.0
  %241 = vmatprep.subr.mxu0 0.0
  %242 = vmatpush1.msra.mxu0 0.0
  %243 = vmatprep.subr.mxu0 0.0
  %244 = vmatpush1.msra.mxu0 0.0
  %245 = vmatprep.subr.mxu0 0.0
  %246 = vmatpush1.msra.mxu0 0.0
  %247 = vmatprep.subr.mxu0 0.0
  %248 = vmatpush1.msra.mxu0 0.0
  %249 = vmatprep.subr.mxu0 0.0
  %250 = vmatpush1.msra.mxu0 0.0
  %251 = vmatprep.subr.mxu0 0.0
  %252 = vmatpush1.msra.mxu0 0.0
  %253 = vmatprep.subr.mxu0 0.0
  %254 = vmatpush1.msra.mxu0 0.0
  %255 = vmatprep.subr.mxu0 0.0
  %256 = vmatpush1.msra.mxu0 0.0
  %257 = vmatprep.subr.mxu0 0.0
  %258 = vmatpush1.msra.mxu0 0.0
  %259 = vmatprep.subr.mxu0 0.0
  %260 = vmatpush1.msra.mxu0 0.0
  %261 = vmatprep.subr.mxu0 0.0
  %262 = vmatpush1.msra.mxu0 0.0
  %263 = vmatprep.subr.mxu0 0.0
  %264 = vmatpush1.msra.mxu0 0.0
  %265 = vmatprep.subr.mxu0 0.0
  %266 = vmatpush1.msra.mxu0 0.0
  %267 = vmatprep.subr.mxu0 0.0
  %268 = vmatpush1.msra.mxu0 0.0
  %269 = vmatprep.subr.mxu0 0.0
  %270 = vmatpush1.msra.mxu0 0.0
  %271 = vmatprep.subr.mxu0 0.0
  %272 = vmatpush1.msra.mxu0 0.0
  %273 = vmatprep.subr.mxu0 0.0
  %274 = vmatpush1.msra.mxu0 0.0
  %275 = vmatprep.subr.mxu0 0.0
  %276 = vmatpush1.msra.mxu0 0.0
  %277 = vmatprep.subr.mxu0 0.0
  %278 = vmatpush1.msra.mxu0 0.0
  %279 = vmatprep.subr.mxu0 0.0
  %280 = vmatpush1.msra.mxu0 0.0
  %281 = vmatprep.subr.mxu0 0.0
  %282 = vmatpush1.msra.mxu0 0.0
  %283 = vmatprep.subr.mxu0 0.0
  %284 = vmatpush1.msra.mxu0 0.0
  %285 = vmatprep.subr.mxu0 0.0
  %286 = vmatpush1.msra.mxu0 0.0
  %287 = vmatprep.subr.mxu0 0.0
  %288 = vmatpush1.msra.mxu0 0.0
  %289 = vmatprep.subr.mxu0 0.0
  %290 = vmatpush1.msra.mxu0 0.0
  %291 = vmatprep.subr.mxu0 0.0
  %292 = vmatpush1.msra.mxu0 0.0
  %293 = vmatprep.subr.mxu0 0.0
  %294 = vmatpush1.msra.mxu0 0.0
  %295 = vmatprep.mubr.f32.mxu0 0.0
  %296 = vmatmul.mubr.f32.gmra.mrb[0].mxu0 %v229
  %v297 = vpop.f32.mrb[0].mxu0
  %v298 = vadd.f32 %v225, %v297
  %v299 = vpop.f32.mrb[0].mxu0
  %300 = vdwg.mxu0
  %vm301 = vcmp.gt.f32.partialorder %v298, 0.0
  %v302 = vmul.f32 %v298, 0.01
  %v303 = vsel %vm301, %v298, %v302
  %v304 = vld [vmem:[%s7] sm:$0xff]
  %v305 = vld [vmem:[%s7 + $0x8] sm:$0xff]
  %v306 = vld [vmem:[%s7 + $0x10] sm:$0xff]
  %v307 = vld [vmem:[%s7 + $0x18] sm:$0xff]
  %v308 = vld [vmem:[%s8] sm:$0x1]
  %v310 = vlaneseq
  %v311 = vshrl.u32 %v310, 7
  %v312 = vsub.s32 0, %v311
  %v313 = vrot.slane %v308, %v312
  %vm315 = vcmask 261120
  %v317 = vsel %vm315, %v303, 0
  %319 = vmatprep.subr.mxu0 0.0
  %320 = vmatpush1.msra.mxu0 %v304
  %321 = vmatprep.subr.mxu0 0.0
  %322 = vmatpush1.msra.mxu0 %v305
  %323 = vmatprep.subr.mxu0 0.0
  %324 = vmatpush1.msra.mxu0 %v306
  %325 = vmatprep.subr.mxu0 0.0
  %326 = vmatpush1.msra.mxu0 %v307
  %327 = vmatprep.subr.mxu0 0.0
  %328 = vmatpush1.msra.mxu0 0.0
  %329 = vmatprep.subr.mxu0 0.0
  %330 = vmatpush1.msra.mxu0 0.0
  %331 = vmatprep.subr.mxu0 0.0
  %332 = vmatpush1.msra.mxu0 0.0
  %333 = vmatprep.subr.mxu0 0.0
  %334 = vmatpush1.msra.mxu0 0.0
  %335 = vmatprep.subr.mxu0 0.0
  %336 = vmatpush1.msra.mxu0 0.0
  %337 = vmatprep.subr.mxu0 0.0
  %338 = vmatpush1.msra.mxu0 0.0
  %339 = vmatprep.subr.mxu0 0.0
  %340 = vmatpush1.msra.mxu0 0.0
  %341 = vmatprep.subr.mxu0 0.0
  %342 = vmatpush1.msra.mxu0 0.0
  %343 = vmatprep.subr.mxu0 0.0
  %344 = vmatpush1.msra.mxu0 0.0
  %345 = vmatprep.subr.mxu0 0.0
  %346 = vmatpush1.msra.mxu0 0.0
  %347 = vmatprep.subr.mxu0 0.0
  %348 = vmatpush1.msra.mxu0 0.0
  %349 = vmatprep.subr.mxu0 0.0
  %350 = vmatpush1.msra.mxu0 0.0
  %351 = vmatprep.subr.mxu0 0.0
  %352 = vmatpush1.msra.mxu0 0.0
  %353 = vmatprep.subr.mxu0 0.0
  %354 = vmatpush1.msra.mxu0 0.0
  %355 = vmatprep.subr.mxu0 0.0
  %356 = vmatpush1.msra.mxu0 0.0
  %357 = vmatprep.subr.mxu0 0.0
  %358 = vmatpush1.msra.mxu0 0.0
  %359 = vmatprep.subr.mxu0 0.0
  %360 = vmatpush1.msra.mxu0 0.0
  %361 = vmatprep.subr.mxu0 0.0
  %362 = vmatpush1.msra.mxu0 0.0
  %363 = vmatprep.subr.mxu0 0.0
  %364 = vmatpush1.msra.mxu0 0.0
  %365 = vmatprep.subr.mxu0 0.0
  %366 = vmatpush1.msra.mxu0 0.0
  %367 = vmatprep.subr.mxu0 0.0
  %368 = vmatpush1.msra.mxu0 0.0
  %369 = vmatprep.subr.mxu0 0.0
  %370 = vmatpush1.msra.mxu0 0.0
  %371 = vmatprep.subr.mxu0 0.0
  %372 = vmatpush1.msra.mxu0 0.0
  %373 = vmatprep.subr.mxu0 0.0
  %374 = vmatpush1.msra.mxu0 0.0
  %375 = vmatprep.subr.mxu0 0.0
  %376 = vmatpush1.msra.mxu0 0.0
  %377 = vmatprep.subr.mxu0 0.0
  %378 = vmatpush1.msra.mxu0 0.0
  %379 = vmatprep.subr.mxu0 0.0
  %380 = vmatpush1.msra.mxu0 0.0
  %381 = vmatprep.subr.mxu0 0.0
  %382 = vmatpush1.msra.mxu0 0.0
  %383 = vmatprep.mubr.f32.mxu0 0.0
  %384 = vmatmul.mubr.f32.gmra.mrb[0].mxu0 %v317
  %v385 = vpop.f32.mrb[0].mxu0
  %v386 = vadd.f32 %v313, %v385
  %v387 = vpop.f32.mrb[0].mxu0
  %388 = vdwg.mxu0
  %vm389 = vcmp.gt.f32.partialorder %v386, 0.0
  %v390 = vmul.f32 %v386, 0.01
  %v391 = vsel %vm389, %v386, %v390
  %v392 = vld [vmem:[%s9] sm:$0x1]
  %v394 = vlaneseq
  %v395 = vshrl.u32 %v394, 7
  %v396 = vsub.s32 0, %v395
  %v397 = vrot.slane %v392, %v396
  %v399 = vmul.f32 %v391, %v397
  %vm400 = vcmask 523264
  %v401 = vsel %vm400, %v399, 0.0
  %402 = vadd.xlane.f32.xlu0 %v401
  %v403 = vpop.xlane.xlu0 %402
  %v404 = vld [vmem:[#allocation2] sm:$0x1]
  %v406 = vlaneseq
  %v407 = vshrl.u32 %v406, 7
  %v408 = vsub.s32 0, %v407
  %v409 = vrot.slane %v404, %v408
  %v411 = vadd.f32 %v403, %v409
  %vm412 = vcmask 7168
  %413 = vst.msk [vmem:[%s11] sm:$0xff] %vm412, %v411
  // Predicated region
  $region46: #{discriminator_forward.1} parent=0 // pred_check
    _
  $region47: #{discriminator_forward.1} parent=0 // pred_check_branch
    %415 = sbr.rel (0) target = $region49
  $region48: #{discriminator_forward.1} parent=0 // pred_region
    _
  $region49: #{discriminator_forward.1} parent=0 // pred_fallthru
    _
  // Predicated region
  $region50: #{discriminator_forward.1} parent=0 // pred_check
    _
  $region51: #{discriminator_forward.1} parent=0 // pred_check_branch
    %417 = sbr.rel (0) target = $region53
  $region52: #{discriminator_forward.1} parent=0 // pred_region
    _
  $region53: #{discriminator_forward.1} parent=0 // pred_fallthru
    _

</llo_original>
